<compile_context>
chip_gen: v7x
topology: tpu7x:2x2x1
jax: 0.10.0
libtpu: 0.0.40
codegen_flags: <defaults>
</compile_context>

<pallas_src>
import functools
import math

import jax
import jax.numpy as jnp
from jax.experimental import pallas as pl
from jax.experimental.pallas import tpu as pltpu

_MIB = 1024 * 1024
_ONE_HOT_MAX_VOCAB = 2048            # <= this: gather via one-hot x table on the MXU
_SINGLE_BUFFER_TABLE_BYTES = 2 * _MIB  # single-buffer the resident table above this
_MAX_RESIDENT_TILE = 1024
_FALLBACK_TILE = 256


def _round_up(x, m):
    return (x + m - 1) // m * m


def _round_down(x, m):
    return (x // m) * m


def _vmem_capacity_bytes():
    """Physical VMEM per TensorCore; per-device-kind fallback if the query fails."""
    try:
        info = pltpu.get_tpu_info()
        for attr in ("vmem_capacity_bytes", "vmem_size_bytes", "vmem_bytes"):
            v = getattr(info, attr, None)
            if v:
                return int(v)
    except Exception:
        pass
    try:
        kind = jax.devices()[0].device_kind.lower()
    except Exception:
        kind = ""
    if "v2" in kind or "v3" in kind:
        return 16 * _MIB
    if "v4" in kind or "v5" in kind or "v6" in kind:
        return 128 * _MIB            # v4/v5e/v5p/v6e: 128 MiB per TC
    return 64 * _MIB                 # v7x per-TC size; conservative default


def _vmem_limit(needed_bytes, cap):
    lim = max(int(needed_bytes) + 2 * _MIB, 32 * _MIB)
    return int(min(lim, int(0.95 * cap)))


# ---------------------------------------------------------------------------
# Fast path: table resident in VMEM, vectorized gather over a whole token tile.
# ---------------------------------------------------------------------------
def _embed_resident_kernel(ids_ref, table_ref, out_ref, *, scale, vocab, use_one_hot):
    # ids_ref  : VMEM (tile, 1) int32 token ids of this tile
    # table_ref: VMEM (vocab, d_model) whole table (constant block, DMA'd once)
    # out_ref  : VMEM (tile, d_model) dense output tile
    ids = jnp.clip(ids_ref[...], 0, vocab - 1)        # clamp OOB ids (PyTorch raises)
    table = table_ref[...]
    if use_one_hot:
        # Small vocab: dense one-hot x table on the MXU — no scalar/loop dependence.
        tile = ids.shape[0]
        cols = jax.lax.broadcasted_iota(jnp.int32, (tile, vocab), 1)
        one_hot = (ids == cols).astype(table.dtype)    # (tile, vocab)
        rows = jnp.dot(one_hot, table, preferred_element_type=jnp.float32)
    else:
        # Larger vocab: batched row gather on the VMEM-resident table.
        # TODO(synk): if this gather fails to lower on an older jaxlib, lower
        # _ONE_HOT_MAX_VOCAB so more shapes take the one-hot MXU path.
        rows = jnp.take(table, ids[:, 0], axis=0, mode="clip").astype(jnp.float32)
    # One full-tile scale multiply (f32 for accuracy), cast back on store.
    out_ref[...] = (rows * jnp.float32(scale)).astype(out_ref.dtype)


def _embed_resident(ids_flat, emb_table, *, tile, use_one_hot, single_buffer_table,
                    vmem_cap):
    n_tok = ids_flat.shape[0]
    vocab, d_model = emb_table.shape
    out_dtype = emb_table.dtype
    itemsize = jnp.dtype(out_dtype).itemsize
    scale = math.sqrt(d_model)

    n_tiles = pl.cdiv(n_tok, tile)
    n_tok_pad = n_tiles * tile
    # Pad ONLY the ids (with valid id 0); the output stays unpadded and the
    # partial last output block is masked on store by Pallas.
    ids2d = jnp.pad(ids_flat, (0, n_tok_pad - n_tok)).reshape(n_tok_pad, 1)

    table_bytes = vocab * d_model * itemsize
    table_buffers = 1 if single_buffer_table else 2
    table_spec_kwargs = {}
    if single_buffer_table:
        # Constant index_map -> the table is fetched once; don't waste VMEM on a
        # second copy (doubles the residency threshold on v7x's 64 MiB VMEM).
        table_spec_kwargs["pipeline_mode"] = pl.Buffered(1)
    table_spec = pl.BlockSpec((vocab, d_model), lambda t: (0, 0), **table_spec_kwargs)

    one_hot_bytes = tile * vocab * 4 if use_one_hot else 0
    needed = (table_buffers * table_bytes
              + 2 * tile * (d_model * itemsize + 4)   # dbl-buffered out tile + ids
              + tile * d_model * 4                    # f32 temp rows
              + one_hot_bytes)
    vmem_limit = _vmem_limit(needed, vmem_cap)

    kernel = functools.partial(_embed_resident_kernel, scale=scale, vocab=vocab,
                               use_one_hot=use_one_hot)
    flops = 2 * n_tok_pad * vocab * d_model if use_one_hot else n_tok_pad * d_model
    cost = pl.CostEstimate(
        flops=flops, transcendentals=0,
        bytes_accessed=table_bytes + n_tok_pad * 4 + n_tok * d_model * itemsize)

    return pl.pallas_call(
        kernel,
        out_shape=jax.ShapeDtypeStruct((n_tok, d_model), out_dtype),
        grid_spec=pltpu.PrefetchScalarGridSpec(
            num_scalar_prefetch=0,
            grid=(n_tiles,),
            in_specs=[pl.BlockSpec((tile, 1), lambda t: (t, 0)),  # per-tile ids
                      table_spec],                                # whole table, 1 DMA
            out_specs=pl.BlockSpec((tile, d_model), lambda t: (t, 0)),
        ),
        compiler_params=pltpu.CompilerParams(
            dimension_semantics=("parallel",),   # tiles independent -> 2 TCs on v7x
            vmem_limit_bytes=vmem_limit,
        ),
        cost_estimate=cost,
    )(ids2d, emb_table)


# ---------------------------------------------------------------------------
# Fallback path: table too large for VMEM -> batched manual-DMA row gather.
# ---------------------------------------------------------------------------
def _embed_dma_gather_kernel(ids_ref, table_hbm_ref, out_ref, rows_ref, sem,
                             *, scale, tile, vocab):
    # ids_ref      : SMEM (tile,) int32 token ids of this tile
    # table_hbm_ref: HBM  (vocab, d_model) full embedding table (pl.ANY)
    # rows_ref     : VMEM (tile, d_model) gather scratch
    # sem          : DMA semaphore shared by all row copies of this tile

    # Issue one row DMA per token (all in flight on the DMA engine).
    @pl.loop(0, tile)
    def _(r):
        tok = ids_ref[r]
        tok = jnp.minimum(jnp.maximum(tok, 0), vocab - 1)     # clamp OOB ids
        pltpu.make_async_copy(table_hbm_ref.at[pl.ds(tok, 1), :],
                              rows_ref.at[pl.ds(r, 1), :], sem).start()

    # Drain: each wait consumes one row-sized completion on the shared semaphore.
    @pl.loop(0, tile)
    def _(r):
        pltpu.make_async_copy(table_hbm_ref.at[pl.ds(0, 1), :],
                              rows_ref.at[pl.ds(r, 1), :], sem).wait()

    # One dense full-tile scale + store (partial last block masked by Pallas).
    out_ref[...] = (rows_ref[...].astype(jnp.float32) * jnp.float32(scale)
                    ).astype(out_ref.dtype)
    # TODO(synk): double-buffer the row gather across grid steps
    # (scratch (2, tile, d_model), prefetch tile t+1 while scaling/storing tile t)
    # to also hide the gather DMA latency behind compute/writeback.


def _embed_dma_gather(ids_flat, emb_table, *, tile, vmem_cap):
    n_tok = ids_flat.shape[0]
    vocab, d_model = emb_table.shape
    out_dtype = emb_table.dtype
    itemsize = jnp.dtype(out_dtype).itemsize
    scale = math.sqrt(d_model)

    n_tiles = pl.cdiv(n_tok, tile)
    n_tok_pad = n_tiles * tile
    ids_pad = jnp.pad(ids_flat, (0, n_tok_pad - n_tok))

    needed = 3 * tile * d_model * itemsize   # gather scratch + dbl-buffered out tile
    vmem_limit = _vmem_limit(needed, vmem_cap)

    kernel = functools.partial(_embed_dma_gather_kernel, scale=scale, tile=tile,
                               vocab=vocab)
    cost = pl.CostEstimate(flops=n_tok_pad * d_model, transcendentals=0,
                           bytes_accessed=n_tok_pad * (4 + 2 * d_model * itemsize))

    return pl.pallas_call(
        kernel,
        out_shape=jax.ShapeDtypeStruct((n_tok, d_model), out_dtype),
        grid_spec=pltpu.PrefetchScalarGridSpec(
            num_scalar_prefetch=0,
            grid=(n_tiles,),
            in_specs=[
                pl.BlockSpec((tile,), lambda t: (t,),
                             memory_space=pltpu.MemorySpace.SMEM),  # per-tile ids
                pl.BlockSpec(memory_space=pl.ANY),                  # table stays in HBM
            ],
            out_specs=pl.BlockSpec((tile, d_model), lambda t: (t, 0)),
            scratch_shapes=[
                pltpu.VMEM((tile, d_model), out_dtype),
                pltpu.SemaphoreType.DMA(()),
            ],
        ),
        compiler_params=pltpu.CompilerParams(
            dimension_semantics=("parallel",),
            vmem_limit_bytes=vmem_limit,
        ),
        cost_estimate=cost,
    )(ids_pad, emb_table)


# ---------------------------------------------------------------------------
# Public wrapper: forward(x) = Embedding(x) * sqrt(d_model)
# ---------------------------------------------------------------------------
def input_embeddings(ids, emb_table, *, max_tile=_MAX_RESIDENT_TILE):
    """ids: int array of any shape, emb_table: (vocab, d_model) -> ids.shape + (d_model,)."""
    vocab, d_model = emb_table.shape
    n_tok = int(math.prod(ids.shape)) if ids.shape else 1
    ids_flat = ids.reshape(-1).astype(jnp.int32)

    itemsize = jnp.dtype(emb_table.dtype).itemsize
    table_bytes = vocab * d_model * itemsize
    cap = _vmem_capacity_bytes()
    budget = int(0.85 * cap)

    single_buffer_table = table_bytes > _SINGLE_BUFFER_TABLE_BYTES
    table_buffers = 1 if single_buffer_table else 2

    # Size the token tile from VMEM left over after the (single-buffered) table:
    # double-buffered output tile + double-buffered id block per token.
    per_tok_bytes = 2 * (d_model * itemsize + 4)
    avail = budget - table_buffers * table_bytes - 2 * _MIB
    tile = 0
    if avail > 0:
        tile = min(max_tile, _round_up(n_tok, 8),
                   _round_down(avail // per_tok_bytes, 8))

    if tile >= 8:
        use_one_hot = vocab <= _ONE_HOT_MAX_VOCAB
        out_flat = _embed_resident(
            ids_flat, emb_table, tile=int(tile), use_one_hot=use_one_hot,
            single_buffer_table=single_buffer_table, vmem_cap=cap)
    else:
        fb_tile = min(_FALLBACK_TILE, _round_up(n_tok, 8))
        out_flat = _embed_dma_gather(ids_flat, emb_table, tile=int(fb_tile),
                                     vmem_cap=cap)

    return out_flat.reshape(*ids.shape, d_model)


if __name__ == "__main__":
    # Small, deterministic setup: batch=2, seq=8, vocab=64, d_model=128
    # (d_model lane-dense: a multiple of 128).
    B, S = 2, 8
    vocab_size, d_model = 64, 128

    key = jax.random.PRNGKey(0)
    k_emb, k_ids = jax.random.split(key)

    # nn.Embedding default init is N(0, 1); reproduce deterministically.
    emb_table = jax.random.normal(k_emb, (vocab_size, d_model), dtype=jnp.float32)
    ids = jax.random.randint(k_ids, (B, S), 0, vocab_size, dtype=jnp.int32)

    out = input_embeddings(ids, emb_table)
    out = jax.block_until_ready(out)

    # Reference check in plain JAX (same semantics as the PyTorch forward).
    ref = jnp.take(emb_table, ids, axis=0) * math.sqrt(d_model)
    assert out.shape == (B, S, d_model)
    assert jnp.allclose(out, ref, atol=1e-4, rtol=1e-4), float(
        jnp.max(jnp.abs(out - ref)))

    print("KERNEL_OK")
</pallas_src>

<mosaic_0001>
module attributes {stable_mosaic.version = 11 : i64} {
  func.func @_embed_resident_kernel(%arg0: i32, %arg1: memref<16x1xi32, #tpu.memory_space<vmem>>, %arg2: memref<64x128xf32, #tpu.memory_space<vmem>>, %arg3: memref<16x128xf32, #tpu.memory_space<vmem>>) attributes {dimension_semantics = [#tpu.dimension_semantics<parallel>], iteration_bounds = array<i64: 1>, scalar_prefetch = 0 : i64, scratch_operands = 0 : i64, tpu.core_type = #tpu.core_type<tc>, window_params = [{transform_indices = @transform_0, window_bounds = array<i64: 16, 1>}, {pipeline_mode = #tpu.pipeline_mode<synchronous>, transform_indices = @transform_1, window_bounds = array<i64: 64, 128>}, {transform_indices = @transform_2, window_bounds = array<i64: 16, 128>}]} {
    %c0 = arith.constant 0 : index
    %c0_0 = arith.constant 0 : index
    %0 = vector.load %arg1[%c0, %c0_0] : memref<16x1xi32, #tpu.memory_space<vmem>>, vector<16x1xi32>
    %c0_i32 = arith.constant 0 : i32
    %c63_i32 = arith.constant 63 : i32
    %1 = vector.broadcast %c0_i32 : i32 to vector<16x1xi32>
    %2 = arith.maxsi %1, %0 : vector<16x1xi32>
    %3 = vector.broadcast %c63_i32 : i32 to vector<16x1xi32>
    %4 = arith.minsi %3, %2 : vector<16x1xi32>
    %c0_1 = arith.constant 0 : index
    %c0_2 = arith.constant 0 : index
    %5 = vector.load %arg2[%c0_1, %c0_2] : memref<64x128xf32, #tpu.memory_space<vmem>>, vector<64x128xf32>
    %6 = tpu.iota {dimensions = array<i32: 1>} : vector<16x64xi32>
    %7 = vector.broadcast %4 : vector<16x1xi32> to vector<16x64xi32>
    %8 = arith.cmpi eq, %7, %6 : vector<16x64xi32>
    %9 = arith.extui %8 : vector<16x64xi1> to vector<16x64xi32>
    %10 = arith.sitofp %9 : vector<16x64xi32> to vector<16x64xf32>
    %cst = arith.constant dense<0.000000e+00> : vector<16x128xf32>
    %11 = tpu.matmul %10, %5, %cst {dimension_numbers = #tpu.dot_dimension_numbers<[1], [0], [0], [1], [0, 0, 1, 1], [], []>} : vector<16x64xf32>, vector<64x128xf32>, vector<16x128xf32> -> vector<16x128xf32>
    %cst_3 = arith.constant 11.3137083 : f32
    %12 = vector.broadcast %cst_3 : f32 to vector<16x128xf32>
    %13 = arith.mulf %11, %12 : vector<16x128xf32>
    %c0_4 = arith.constant 0 : index
    %c0_5 = arith.constant 0 : index
    %14 = vector.load %arg3[%c0_4, %c0_5] : memref<16x128xf32, #tpu.memory_space<vmem>>, vector<16x128xf32>
    tpu.vector_store %arg3[%c0_4, %c0_5], %13 {strides = array<i32>} : memref<16x128xf32, #tpu.memory_space<vmem>>, vector<16x128xf32>,
    return
  }
  func.func @transform_0(%arg0: i32) -> (i32, i32) {
    %c0_i32 = arith.constant 0 : i32
    %c0_i32_0 = arith.constant 0 : i32
    return %arg0, %c0_i32 : i32, i32
  }
  func.func @transform_1(%arg0: i32) -> (i32, i32) {
    %c0_i32 = arith.constant 0 : i32
    %c0_i32_0 = arith.constant 0 : i32
    %c0_i32_1 = arith.constant 0 : i32
    return %c0_i32, %c0_i32_0 : i32, i32
  }
  func.func @transform_2(%arg0: i32) -> (i32, i32) {
    %c0_i32 = arith.constant 0 : i32
    %c0_i32_0 = arith.constant 0 : i32
    return %arg0, %c0_i32 : i32, i32
  }
}

</mosaic_0001>

<llo_original>
// kernel: tpu_custom_call.1
$region0: #{tpu_custom_call.1}
  #allocation0 [shape = 'u32[]', space=smem, size = 0x4, offset = 0x4, fixed_abs, tag = 'smem constant byte address 0x4 - core index']
  #allocation1 [shape = 'u32[144,128]{1,0:T(1,128)}', space=vmem, size = 0x12000, scoped, tag = 'internal scratch']
  %s0 = inlined_call_operand.vmem [shape: s32[16,1], index: 0, kind: input, shape index: {}]
  %s1 = inlined_call_operand.hbm [shape: f32[64,128], index: 1, kind: input, shape index: {}]
  %s2 = inlined_call_operand.hbm [shape: f32[16,128], index: 2, kind: output, shape index: {}]
  %s3 = sld [smem:[#allocation0]]
  $region22: #{tpu_custom_call.1} parent=0
    _
  %s5 = ssub.s32 1, %s3
  %s6 = scalar_select 0, %s5, %s3
  $region1: #{tpu_custom_call.1} parent=0
    #allocation2 [shape = 'u8[32768]{0}', space=vmem, size = 0x8000, scoped, tag = 'input window, operand 1, single buffered']
    #allocation3 [shape = 's32[1]{0}', space=sflag, size = 0x4, scoped, tag = 'scoped memory for tpu_custom_call.1']
    #allocation4 [shape = 's32[1]{0}', space=sflag, size = 0x4, scoped, tag = 'scoped memory for tpu_custom_call.1']
    #allocation5 [shape = 'u8[8192]{0}', space=vmem, size = 0x2000, scoped, tag = 'output window, operand 0, single buffered']
    %7 = vsyncpa [#allocation3], 0
    %8 = vsyncpa [#allocation4], 0
    // Predicated region
    $region2: #{tpu_custom_call.1} parent=1 // pred_check
      _
    $region3: #{tpu_custom_call.1} parent=1 // pred_check_branch
      %10 = sbr.rel (0) target = $region5
    $region4: #{tpu_custom_call.1} parent=1 // pred_region
      _
    $region5: #{tpu_custom_call.1} parent=1 // pred_fallthru
      _
    // Predicated region
    $region6: #{tpu_custom_call.1} parent=1 // pred_check
      _
    $region7: #{tpu_custom_call.1} parent=1 // pred_check_branch
      %12 = sbr.rel (0) target = $region9
    $region8: #{tpu_custom_call.1} parent=1 // pred_region
      %s14 = ssub.s32 1024, 1024
      %15 = vsyncadd [#allocation3], %s14
      %s16 = sshll.u32 [#allocation2], 4
      %s17 = int_to_ptr.vmem [resolvable:$true] %s16
      %22 = dma.hbm_to_vmem [thread:$0]  %s1, 1024, %s17, [#allocation3], 128, 128, 8
    $region9: #{tpu_custom_call.1} parent=1 // pred_fallthru
      _
    // Predicated region
    $region10: #{tpu_custom_call.1} parent=1 // pred_check
      _
    $region11: #{tpu_custom_call.1} parent=1 // pred_check_branch
      %24 = sbr.rel (0) target = $region13
    $region12: #{tpu_custom_call.1} parent=1 // pred_region
      %25 = dma.done [#allocation3], 1024
    $region13: #{tpu_custom_call.1} parent=1 // pred_fallthru
      _
    %v26 = vld [vmem:[%s0] sm:$0xff]
    %v27 = vld [vmem:[%s0 + $0x8] sm:$0xff]
    %vm28 = vcmp.gt.s32.totalorder %v26, 0
    %v29 = vsel %vm28, %v26, 0
    %vm30 = vcmp.gt.s32.totalorder %v27, 0
    %v31 = vsel %vm30, %v27, 0
    %vm32 = vcmp.lt.s32.totalorder %v29, 63
    %v33 = vsel %vm32, %v29, 63
    %vm34 = vcmp.lt.s32.totalorder %v31, 63
    %v35 = vsel %vm34, %v31, 63
    %v36 = vld [vmem:[#allocation2] sm:$0xff]
    %v37 = vld [vmem:[#allocation2 + $0x8] sm:$0xff]
    %v38 = vld [vmem:[#allocation2 + $0x10] sm:$0xff]
    %v39 = vld [vmem:[#allocation2 + $0x18] sm:$0xff]
    %v40 = vld [vmem:[#allocation2 + $0x20] sm:$0xff]
    %v41 = vld [vmem:[#allocation2 + $0x28] sm:$0xff]
    %v42 = vld [vmem:[#allocation2 + $0x30] sm:$0xff]
    %v43 = vld [vmem:[#allocation2 + $0x38] sm:$0xff]
    %v44 = vlaneseq
    %v45 = vand.u32 %v44, 127
    %46 = vset.pattern.permute.xlu0 0
    %47 = vperm.xlu0 %46, %v33
    %v48 = vpop.permute.xlu0 %47
    %49 = vset.pattern.permute.xlu0 0
    %50 = vperm.xlu0 %49, %v35
    %v51 = vpop.permute.xlu0 %50
    %vm52 = vcmp.eq.s32.totalorder %v48, %v45
    %vm53 = vcmp.eq.s32.totalorder %v51, %v45
    %v54 = vsel %vm52, 1, 0
    %v55 = vsel %vm53, 1, 0
    %v56 = vcvt.s32.f32 %v54
    %v57 = vcvt.s32.f32 %v55
    %vm58 = vcmask 523264
    %v60 = vsel %vm58, %v56, 0
    %v63 = vsel %vm58, %v57, 0
    %65 = vmatprep.subr.mxu0 0.0
    %66 = vmatpush1.msra.mxu0 %v36
    %67 = vmatprep.subr.mxu0 0.0
    %68 = vmatpush1.msra.mxu0 %v37
    %69 = vmatprep.subr.mxu0 0.0
    %70 = vmatpush1.msra.mxu0 %v38
    %71 = vmatprep.subr.mxu0 0.0
    %72 = vmatpush1.msra.mxu0 %v39
    %73 = vmatprep.subr.mxu0 0.0
    %74 = vmatpush1.msra.mxu0 %v40
    %75 = vmatprep.subr.mxu0 0.0
    %76 = vmatpush1.msra.mxu0 %v41
    %77 = vmatprep.subr.mxu0 0.0
    %78 = vmatpush1.msra.mxu0 %v42
    %79 = vmatprep.subr.mxu0 0.0
    %80 = vmatpush1.msra.mxu0 %v43
    %81 = vmatprep.subr.mxu0 0.0
    %82 = vmatpush1.msra.mxu0 0.0
    %83 = vmatprep.subr.mxu0 0.0
    %84 = vmatpush1.msra.mxu0 0.0
    %85 = vmatprep.subr.mxu0 0.0
    %86 = vmatpush1.msra.mxu0 0.0
    %87 = vmatprep.subr.mxu0 0.0
    %88 = vmatpush1.msra.mxu0 0.0
    %89 = vmatprep.subr.mxu0 0.0
    %90 = vmatpush1.msra.mxu0 0.0
    %91 = vmatprep.subr.mxu0 0.0
    %92 = vmatpush1.msra.mxu0 0.0
    %93 = vmatprep.subr.mxu0 0.0
    %94 = vmatpush1.msra.mxu0 0.0
    %95 = vmatprep.subr.mxu0 0.0
    %96 = vmatpush1.msra.mxu0 0.0
    %97 = vmatprep.subr.mxu0 0.0
    %98 = vmatpush1.msra.mxu0 0.0
    %99 = vmatprep.subr.mxu0 0.0
    %100 = vmatpush1.msra.mxu0 0.0
    %101 = vmatprep.subr.mxu0 0.0
    %102 = vmatpush1.msra.mxu0 0.0
    %103 = vmatprep.subr.mxu0 0.0
    %104 = vmatpush1.msra.mxu0 0.0
    %105 = vmatprep.subr.mxu0 0.0
    %106 = vmatpush1.msra.mxu0 0.0
    %107 = vmatprep.subr.mxu0 0.0
    %108 = vmatpush1.msra.mxu0 0.0
    %109 = vmatprep.subr.mxu0 0.0
    %110 = vmatpush1.msra.mxu0 0.0
    %111 = vmatprep.subr.mxu0 0.0
    %112 = vmatpush1.msra.mxu0 0.0
    %113 = vmatprep.subr.mxu0 0.0
    %114 = vmatpush1.msra.mxu0 0.0
    %115 = vmatprep.subr.mxu0 0.0
    %116 = vmatpush1.msra.mxu0 0.0
    %117 = vmatprep.subr.mxu0 0.0
    %118 = vmatpush1.msra.mxu0 0.0
    %119 = vmatprep.subr.mxu0 0.0
    %120 = vmatpush1.msra.mxu0 0.0
    %121 = vmatprep.subr.mxu0 0.0
    %122 = vmatpush1.msra.mxu0 0.0
    %123 = vmatprep.subr.mxu0 0.0
    %124 = vmatpush1.msra.mxu0 0.0
    %125 = vmatprep.subr.mxu0 0.0
    %126 = vmatpush1.msra.mxu0 0.0
    %127 = vmatprep.subr.mxu0 0.0
    %128 = vmatpush1.msra.mxu0 0.0
    %129 = vmatprep.mubr.f32.mxu0 0.0
    %130 = vmatmul.mubr.f32.gmra.mrb[0].mxu0 %v60
    %v131 = vpop.f32.mrb[0].mxu0
    %v132 = vadd.f32 0.0, %v131
    %v133 = vpop.f32.mrb[0].mxu0
    %134 = vmatprep.mubr.f32.mxu0 0.0
    %135 = vmatmul.mubr.f32.gmra.mrb[0].mxu0 %v63
    %v136 = vpop.f32.mrb[0].mxu0
    %v137 = vadd.f32 0.0, %v136
    %v138 = vpop.f32.mrb[0].mxu0
    %139 = vdwg.mxu0
    %v140 = vmul.f32 %v132, 11.313708
    %v141 = vmul.f32 %v137, 11.313708
    %142 = vst [vmem:[#allocation5] sm:$0xff] %v140
    %143 = vst [vmem:[#allocation5 + $0x8] sm:$0xff] %v141
    // Predicated region
    $region14: #{tpu_custom_call.1} parent=1 // pred_check
      _
    $region15: #{tpu_custom_call.1} parent=1 // pred_check_branch
      %145 = sbr.rel (0) target = $region17
    $region16: #{tpu_custom_call.1} parent=1 // pred_region
      %s147 = ssub.s32 256, 256
      %148 = vsyncadd [#allocation4], %s147
      %s149 = sshll.u32 [#allocation5], 4
      %s150 = int_to_ptr.vmem [resolvable:$true] %s149
      %155 = dma.vmem_to_hbm [thread:$0]  %s150, 256, %s2, [#allocation4], 128, 128, 8
    $region17: #{tpu_custom_call.1} parent=1 // pred_fallthru
      _
    // Predicated region
    $region18: #{tpu_custom_call.1} parent=1 // pred_check
      _
    $region19: #{tpu_custom_call.1} parent=1 // pred_check_branch
      %157 = sbr.rel (0) target = $region21
    $region20: #{tpu_custom_call.1} parent=1 // pred_region
      %158 = dma.done [#allocation4], 256
    $region21: #{tpu_custom_call.1} parent=1 // pred_fallthru
      _
    %159 = vsyncpa [#allocation3], 1
    %160 = vsyncpa [#allocation4], 1

</llo_original>
